<compile_context>
chip_gen: v5e
topology: v5e:2x2
jax: 0.10.0
libtpu: 0.0.40
codegen_flags: <defaults>
</compile_context>

<pallas_src>
import functools

import jax
import jax.numpy as jnp
from jax import lax
from jax.experimental import pallas as pl
from jax.experimental.pallas import tpu as pltpu


def _swa_kernel(q_ref, k_ref, v_ref, wq_ref, wk_ref, wv_ref, wo_ref, bo_ref,
                o_ref, kp_ref, vp_ref, *,
                heads, head_dim, window_size, seq_len, q_tile, key_win):
    """Grid step = (batch element, query tile).

    Ref shapes:
      q_ref: (1, H, TQ, D)        k_ref/v_ref: (1, H, L, D)   (read at qi == 0 only)
      wq/wk/wv: (D, D) pre-transposed   wo: (E, E) pre-transposed   bo: (1, E)
      o_ref: (1, TQ, E)
      kp_ref/vp_ref: (H, L, D) f32 VMEM scratch holding the projected K/V for the
        current batch element (filled once per batch element, reused by all tiles).
    """
    H, D, W, L, TQ, KW = heads, head_dim, window_size, seq_len, q_tile, key_win
    E = H * D

    qi = pl.program_id(1)
    q0 = qi * TQ                                # absolute index of first query row

    # ---- per-batch K/V projection into VMEM scratch (once per batch element) ----
    @pl.when(qi == 0)
    def _():
        k3 = k_ref[0].astype(jnp.float32)                              # (H, L, D)
        v3 = v_ref[0].astype(jnp.float32)
        kp_ref[...] = jnp.dot(
            k3.reshape(H * L, D), wk_ref[...].astype(jnp.float32),
            preferred_element_type=jnp.float32).reshape(H, L, D)
        vp_ref[...] = jnp.dot(
            v3.reshape(H * L, D), wv_ref[...].astype(jnp.float32),
            preferred_element_type=jnp.float32).reshape(H, L, D)

    # Key/value window start: 8-aligned, guaranteed to cover every in-band key of
    # this query tile (KW was padded by +7 then rounded up to a multiple of 8).
    if KW == L:
        ks = 0
    else:
        ks = jnp.clip(((q0 - W) // 8) * 8, 0, L - KW)
        ks = pl.multiple_of(ks, 8)

    # ---- Q projection: one big-M matmul (heads batched on sublanes) ----
    q3 = q_ref[0].astype(jnp.float32)                                  # (H, TQ, D)
    qp = jnp.dot(q3.reshape(H * TQ, D), wq_ref[...].astype(jnp.float32),
                 preferred_element_type=jnp.float32).reshape(H, TQ, D)

    kh = kp_ref[:, pl.ds(ks, KW), :]                                   # (H, KW, D)
    vh = vp_ref[:, pl.ds(ks, KW), :]

    # ---- band mask & zero-slot bookkeeping (head-invariant, computed once) ----
    abs_q = q0 + lax.broadcasted_iota(jnp.int32, (TQ, KW), 0)
    abs_k = ks + lax.broadcasted_iota(jnp.int32, (TQ, KW), 1)
    band = jnp.abs(abs_q - abs_k) <= W                                 # (TQ, KW)

    qrow = q0 + lax.broadcasted_iota(jnp.int32, (TQ, 1), 0)
    n_valid = (jnp.minimum(qrow + W, L - 1)
               - jnp.maximum(qrow - W, 0) + 1).astype(jnp.float32)
    n_invalid = (jnp.float32(2 * W + 1) - n_valid)[None]               # (1, TQ, 1)
    has_invalid = n_invalid > 0.0

    # ---- windowed scores + softmax over the zero-initialized buffer + PV,
    #      all heads batched in a single einsum each ----
    s = jnp.einsum('htd,hkd->htk', qp, kh,
                   preferred_element_type=jnp.float32)                 # (H, TQ, KW)
    s = jnp.where(band[None], s, jnp.float32(-1e30))
    m_valid = jnp.max(s, axis=-1, keepdims=True)                       # (H, TQ, 1)
    # the softmax max also sees the zeros sitting in the unfilled buffer slots
    m = jnp.where(has_invalid, jnp.maximum(m_valid, 0.0), m_valid)
    p = jnp.exp(s - m)                                                 # masked -> 0
    z = jnp.sum(p, axis=-1, keepdims=True) + n_invalid * jnp.exp(-m)
    r = pl.reciprocal(z, approx=True)                                  # EUP path
    inv_z = r * (2.0 - z * r)                                          # Newton: f32 accurate

    o3 = jnp.einsum('htk,hkd->htd', p, vh,
                    preferred_element_type=jnp.float32) * inv_z        # (H, TQ, D)

    # ---- fold each head's slice of fc_out directly (no lane-axis concat) ----
    wo_t = wo_ref[...].astype(jnp.float32)                             # (E, E) pre-transposed
    y = jnp.zeros((TQ, E), jnp.float32)
    for h in range(H):                     # H is small; static unroll is fine
        y = y + jnp.dot(o3[h], wo_t[h * D:(h + 1) * D, :],
                        preferred_element_type=jnp.float32)

    o_ref[0] = (y + bo_ref[...].astype(jnp.float32)).astype(o_ref.dtype)


def sliding_window_attention(value, key, query, wv, wk, wq, wo, bo,
                             heads, window_size, q_tile=128):
    N, L, E = query.shape
    H = heads
    D = E // H
    W = window_size

    # Query tile: use q_tile when it divides L, otherwise fall back to one tile.
    TQ = q_tile if (L % q_tile == 0 and L > q_tile) else L
    num_q_tiles = L // TQ
    # Key window per query tile: 8-aligned superset of [q0 - W, q0 + TQ + W).
    kw_pad = -(-(TQ + 2 * W + 7) // 8) * 8
    KW = L if kw_pad >= L else kw_pad

    # Host-side layout prep (cheap, once per call, outside the kernel):
    #   * split heads so per-head slices inside the kernel are contiguous
    #   * pre-transpose every nn.Linear weight (y = x @ W.T)
    def split_heads(x):                        # (N, L, E) -> (N, H, L, D)
        return x.reshape(N, L, H, D).transpose(0, 2, 1, 3)

    q4, k4, v4 = split_heads(query), split_heads(key), split_heads(value)
    wq_t, wk_t, wv_t, wo_t = wq.T, wk.T, wv.T, wo.T

    kernel = functools.partial(
        _swa_kernel, heads=H, head_dim=D, window_size=W,
        seq_len=L, q_tile=TQ, key_win=KW)

    return pl.pallas_call(
        kernel,
        out_shape=jax.ShapeDtypeStruct((N, L, E), query.dtype),
        grid_spec=pltpu.PrefetchScalarGridSpec(
            num_scalar_prefetch=0,
            grid=(N, num_q_tiles),
            in_specs=[
                pl.BlockSpec((1, H, TQ, D), lambda n, qi: (n, 0, qi, 0)),  # Q tile
                pl.BlockSpec((1, H, L, D), lambda n, qi: (n, 0, 0, 0)),    # K (full L)
                pl.BlockSpec((1, H, L, D), lambda n, qi: (n, 0, 0, 0)),    # V (full L)
                pl.BlockSpec((D, D), lambda n, qi: (0, 0)),                # Wq^T
                pl.BlockSpec((D, D), lambda n, qi: (0, 0)),                # Wk^T
                pl.BlockSpec((D, D), lambda n, qi: (0, 0)),                # Wv^T
                pl.BlockSpec((E, E), lambda n, qi: (0, 0)),                # Wo^T
                pl.BlockSpec((1, E), lambda n, qi: (0, 0)),                # bo
            ],
            out_specs=pl.BlockSpec((1, TQ, E), lambda n, qi: (n, qi, 0)),
            scratch_shapes=[pltpu.VMEM((H, L, D), jnp.float32),   # projected K
                            pltpu.VMEM((H, L, D), jnp.float32)],  # projected V
        ),
        compiler_params=pltpu.CompilerParams(
            # q-tile axis carries the per-batch projected-K/V scratch -> arbitrary.
            dimension_semantics=("parallel", "arbitrary"),
            vmem_limit_bytes=64 * 1024 * 1024),
    )(q4, k4, v4, wq_t, wk_t, wv_t, wo_t, bo)


def _reference(value, key, query, wv, wk, wq, wo, bo, heads, window_size):
    """Pure-JAX mirror of the intended PyTorch semantics (for verification)."""
    N, L, E = query.shape
    D = E // heads
    W = window_size

    def proj(x, w):
        xh = x.reshape(N, L, heads, D).astype(jnp.float32)
        return jnp.einsum('nlhd,od->nlho', xh, w.astype(jnp.float32))

    V = proj(value, wv)
    K = proj(key, wk)
    Q = proj(query, wq)

    scores = jnp.zeros((N, heads, L, 2 * W + 1), jnp.float32)
    for i in range(L):
        start = max(0, i - W)
        end = min(L, i + W + 1)
        s = jnp.einsum('nhd,nkhd->nhk', Q[:, i], K[:, start:end])
        scores = scores.at[:, :, i, start - i + W:end - i + W].set(s)
    attn = jax.nn.softmax(scores, axis=-1)

    out = jnp.zeros((N, L, heads, D), jnp.float32)
    for i in range(L):
        start = max(0, i - W)
        end = min(L, i + W + 1)
        a = attn[:, :, i, start - i + W:end - i + W]
        out = out.at[:, i].set(jnp.einsum('nhk,nkhd->nhd', a, V[:, start:end]))
    out = out.reshape(N, L, E)
    return jnp.einsum('nle,oe->nlo', out, wo.astype(jnp.float32)) + bo


def _make_inputs(key, N, L, E, H):
    D = E // H
    ks = jax.random.split(key, 8)
    value = jax.random.normal(ks[0], (N, L, E), jnp.float32)
    key_in = jax.random.normal(ks[1], (N, L, E), jnp.float32)
    query = jax.random.normal(ks[2], (N, L, E), jnp.float32)
    wv = jax.random.normal(ks[3], (D, D), jnp.float32) * (1.0 / D ** 0.5)
    wk = jax.random.normal(ks[4], (D, D), jnp.float32) * (1.0 / D ** 0.5)
    wq = jax.random.normal(ks[5], (D, D), jnp.float32) * (1.0 / D ** 0.5)
    wo = jax.random.normal(ks[6], (E, E), jnp.float32) * (1.0 / E ** 0.5)
    bo = jax.random.normal(ks[7], (1, E), jnp.float32) * 0.1
    return value, key_in, query, wv, wk, wq, wo, bo


if __name__ == "__main__":
    root = jax.random.PRNGKey(0)
    k1, k2 = jax.random.split(root)

    # Case 1: module-sized toy shapes, single query tile (TQ == L).
    N, L, E, H, W = 2, 8, 32, 4, 2
    value, key_in, query, wv, wk, wq, wo, bo = _make_inputs(k1, N, L, E, H)
    out = sliding_window_attention(value, key_in, query, wv, wk, wq, wo, bo, H, W)
    out = jax.block_until_ready(out)
    ref = _reference(value, key_in, query, wv, wk, wq, wo, bo, H, W)
    err1 = float(jnp.max(jnp.abs(out - ref)))
    assert jnp.allclose(out, ref, atol=5e-4, rtol=5e-4), f"case1 max_err={err1}"

    # Case 2: exercises query tiling, clamped 8-aligned key windows and the
    # once-per-batch projected-K/V scratch reuse (TQ=8 < L=32).
    N, L, E, H, W = 2, 32, 32, 4, 3
    value, key_in, query, wv, wk, wq, wo, bo = _make_inputs(k2, N, L, E, H)
    out2 = sliding_window_attention(value, key_in, query, wv, wk, wq, wo, bo, H, W,
                                    q_tile=8)
    out2 = jax.block_until_ready(out2)
    ref2 = _reference(value, key_in, query, wv, wk, wq, wo, bo, H, W)
    err2 = float(jnp.max(jnp.abs(out2 - ref2)))
    assert jnp.allclose(out2, ref2, atol=5e-4, rtol=5e-4), f"case2 max_err={err2}"

    print("KERNEL_OK")
</pallas_src>

<mosaic_0001>
module attributes {stable_mosaic.version = 11 : i64} {
  func.func @_swa_kernel(%arg0: i32, %arg1: i32, %arg2: memref<1x4x8x8xf32, #tpu.memory_space<vmem>>, %arg3: memref<1x4x8x8xf32, #tpu.memory_space<vmem>>, %arg4: memref<1x4x8x8xf32, #tpu.memory_space<vmem>>, %arg5: memref<8x8xf32, #tpu.memory_space<vmem>>, %arg6: memref<8x8xf32, #tpu.memory_space<vmem>>, %arg7: memref<8x8xf32, #tpu.memory_space<vmem>>, %arg8: memref<32x32xf32, #tpu.memory_space<vmem>>, %arg9: memref<1x32xf32, #tpu.memory_space<vmem>>, %arg10: memref<1x8x32xf32, #tpu.memory_space<vmem>>, %arg11: memref<4x8x8xf32, #tpu.memory_space<vmem>>, %arg12: memref<4x8x8xf32, #tpu.memory_space<vmem>>) attributes {dimension_semantics = [#tpu.dimension_semantics<parallel>, #tpu.dimension_semantics<arbitrary>], iteration_bounds = array<i64: 2, 1>, scalar_prefetch = 0 : i64, scratch_operands = 2 : i64, tpu.core_type = #tpu.core_type<tc>, window_params = [{transform_indices = @transform_0, window_bounds = array<i64: 1, 4, 8, 8>}, {transform_indices = @transform_1, window_bounds = array<i64: 1, 4, 8, 8>}, {transform_indices = @transform_2, window_bounds = array<i64: 1, 4, 8, 8>}, {pipeline_mode = #tpu.pipeline_mode<synchronous>, transform_indices = @transform_3, window_bounds = array<i64: 8, 8>}, {pipeline_mode = #tpu.pipeline_mode<synchronous>, transform_indices = @transform_4, window_bounds = array<i64: 8, 8>}, {pipeline_mode = #tpu.pipeline_mode<synchronous>, transform_indices = @transform_5, window_bounds = array<i64: 8, 8>}, {pipeline_mode = #tpu.pipeline_mode<synchronous>, transform_indices = @transform_6, window_bounds = array<i64: 32, 32>}, {pipeline_mode = #tpu.pipeline_mode<synchronous>, transform_indices = @transform_7, window_bounds = array<i64: 1, 32>}, {transform_indices = @transform_8, window_bounds = array<i64: 1, 8, 32>}]} {
    %c8_i32 = arith.constant 8 : i32
    %0 = arith.muli %arg1, %c8_i32 : i32
    %c0_i32 = arith.constant 0 : i32
    %1 = arith.cmpi eq, %arg1, %c0_i32 : i32
    %2 = arith.extui %1 : i1 to i32
    %c0_i32_0 = arith.constant 0 : i32
    %3 = arith.cmpi ne, %2, %c0_i32_0 : i32
    scf.if %3 {
      %c0_38 = arith.constant 0 : index
      %c0_39 = arith.constant 0 : index
      %c0_40 = arith.constant 0 : index
      %c0_41 = arith.constant 0 : index
      %102 = vector.load %arg3[%c0_38, %c0_39, %c0_40, %c0_41] : memref<1x4x8x8xf32, #tpu.memory_space<vmem>>, vector<1x4x8x8xf32>
      %103 = vector.shape_cast %102 : vector<1x4x8x8xf32> to vector<4x8x8xf32>
      %c0_42 = arith.constant 0 : index
      %c0_43 = arith.constant 0 : index
      %c0_44 = arith.constant 0 : index
      %c0_45 = arith.constant 0 : index
      %104 = vector.load %arg4[%c0_42, %c0_43, %c0_44, %c0_45] : memref<1x4x8x8xf32, #tpu.memory_space<vmem>>, vector<1x4x8x8xf32>
      %105 = vector.shape_cast %104 : vector<1x4x8x8xf32> to vector<4x8x8xf32>
      %106 = vector.shape_cast %103 : vector<4x8x8xf32> to vector<32x8xf32>
      %c0_46 = arith.constant 0 : index
      %c0_47 = arith.constant 0 : index
      %107 = vector.load %arg6[%c0_46, %c0_47] : memref<8x8xf32, #tpu.memory_space<vmem>>, vector<8x8xf32>
      %cst_48 = arith.constant dense<0.000000e+00> : vector<32x8xf32>
      %108 = tpu.matmul %106, %107, %cst_48 {dimension_numbers = #tpu.dot_dimension_numbers<[1], [0], [0], [1], [0, 0, 1, 1], [], []>} : vector<32x8xf32>, vector<8x8xf32>, vector<32x8xf32> -> vector<32x8xf32>
      %109 = vector.shape_cast %108 : vector<32x8xf32> to vector<4x8x8xf32>
      %c0_49 = arith.constant 0 : index
      %c0_50 = arith.constant 0 : index
      %c0_51 = arith.constant 0 : index
      %110 = vector.load %arg11[%c0_49, %c0_50, %c0_51] : memref<4x8x8xf32, #tpu.memory_space<vmem>>, vector<4x8x8xf32>
      tpu.vector_store %arg11[%c0_49, %c0_50, %c0_51], %109 {strides = array<i32>} : memref<4x8x8xf32, #tpu.memory_space<vmem>>, vector<4x8x8xf32>,
      %111 = vector.shape_cast %105 : vector<4x8x8xf32> to vector<32x8xf32>
      %c0_52 = arith.constant 0 : index
      %c0_53 = arith.constant 0 : index
      %112 = vector.load %arg7[%c0_52, %c0_53] : memref<8x8xf32, #tpu.memory_space<vmem>>, vector<8x8xf32>
      %cst_54 = arith.constant dense<0.000000e+00> : vector<32x8xf32>
      %113 = tpu.matmul %111, %112, %cst_54 {dimension_numbers = #tpu.dot_dimension_numbers<[1], [0], [0], [1], [0, 0, 1, 1], [], []>} : vector<32x8xf32>, vector<8x8xf32>, vector<32x8xf32> -> vector<32x8xf32>
      %114 = vector.shape_cast %113 : vector<32x8xf32> to vector<4x8x8xf32>
      %c0_55 = arith.constant 0 : index
      %c0_56 = arith.constant 0 : index
      %c0_57 = arith.constant 0 : index
      %115 = vector.load %arg12[%c0_55, %c0_56, %c0_57] : memref<4x8x8xf32, #tpu.memory_space<vmem>>, vector<4x8x8xf32>
      tpu.vector_store %arg12[%c0_55, %c0_56, %c0_57], %114 {strides = array<i32>} : memref<4x8x8xf32, #tpu.memory_space<vmem>>, vector<4x8x8xf32>,
    } else {
    }
    %c0 = arith.constant 0 : index
    %c0_1 = arith.constant 0 : index
    %c0_2 = arith.constant 0 : index
    %c0_3 = arith.constant 0 : index
    %4 = vector.load %arg2[%c0, %c0_1, %c0_2, %c0_3] : memref<1x4x8x8xf32, #tpu.memory_space<vmem>>, vector<1x4x8x8xf32>
    %5 = vector.shape_cast %4 : vector<1x4x8x8xf32> to vector<4x8x8xf32>
    %6 = vector.shape_cast %5 : vector<4x8x8xf32> to vector<32x8xf32>
    %c0_4 = arith.constant 0 : index
    %c0_5 = arith.constant 0 : index
    %7 = vector.load %arg5[%c0_4, %c0_5] : memref<8x8xf32, #tpu.memory_space<vmem>>, vector<8x8xf32>
    %cst = arith.constant dense<0.000000e+00> : vector<32x8xf32>
    %8 = tpu.matmul %6, %7, %cst {dimension_numbers = #tpu.dot_dimension_numbers<[1], [0], [0], [1], [0, 0, 1, 1], [], []>} : vector<32x8xf32>, vector<8x8xf32>, vector<32x8xf32> -> vector<32x8xf32>
    %9 = vector.shape_cast %8 : vector<32x8xf32> to vector<4x8x8xf32>
    %c0_6 = arith.constant 0 : index
    %c0_7 = arith.constant 0 : index
    %c0_8 = arith.constant 0 : index
    %10 = vector.load %arg11[%c0_6, %c0_7, %c0_8] : memref<4x8x8xf32, #tpu.memory_space<vmem>>, vector<4x8x8xf32>
    %c0_9 = arith.constant 0 : index
    %c0_10 = arith.constant 0 : index
    %c0_11 = arith.constant 0 : index
    %11 = vector.load %arg12[%c0_9, %c0_10, %c0_11] : memref<4x8x8xf32, #tpu.memory_space<vmem>>, vector<4x8x8xf32>
    %12 = tpu.iota {dimensions = array<i32: 0>} : vector<8x8xi32>
    %13 = vector.broadcast %0 : i32 to vector<8x8xi32>
    %14 = arith.addi %13, %12 : vector<8x8xi32>
    %15 = tpu.iota {dimensions = array<i32: 1>} : vector<8x8xi32>
    %c0_i32_12 = arith.constant 0 : i32
    %16 = vector.broadcast %c0_i32_12 : i32 to vector<8x8xi32>
    %17 = arith.addi %16, %15 : vector<8x8xi32>
    %18 = arith.subi %14, %17 : vector<8x8xi32>
    %19 = math.absi %18 : vector<8x8xi32>
    %c2_i32 = arith.constant 2 : i32
    %20 = vector.broadcast %c2_i32 : i32 to vector<8x8xi32>
    %21 = arith.cmpi sle, %19, %20 : vector<8x8xi32>
    %22 = tpu.iota {dimensions = array<i32: 0>} : vector<8x1xi32>
    %23 = vector.broadcast %0 : i32 to vector<8x1xi32>
    %24 = arith.addi %23, %22 : vector<8x1xi32>
    %c2_i32_13 = arith.constant 2 : i32
    %25 = vector.broadcast %c2_i32_13 : i32 to vector<8x1xi32>
    %26 = arith.addi %24, %25 : vector<8x1xi32>
    %c7_i32 = arith.constant 7 : i32
    %27 = vector.broadcast %c7_i32 : i32 to vector<8x1xi32>
    %28 = arith.minsi %26, %27 : vector<8x1xi32>
    %c2_i32_14 = arith.constant 2 : i32
    %29 = vector.broadcast %c2_i32_14 : i32 to vector<8x1xi32>
    %30 = arith.subi %24, %29 : vector<8x1xi32>
    %c0_i32_15 = arith.constant 0 : i32
    %31 = vector.broadcast %c0_i32_15 : i32 to vector<8x1xi32>
    %32 = arith.maxsi %30, %31 : vector<8x1xi32>
    %33 = arith.subi %28, %32 : vector<8x1xi32>
    %c1_i32 = arith.constant 1 : i32
    %34 = vector.broadcast %c1_i32 : i32 to vector<8x1xi32>
    %35 = arith.addi %33, %34 : vector<8x1xi32>
    %36 = arith.sitofp %35 : vector<8x1xi32> to vector<8x1xf32>
    %cst_16 = arith.constant 5.000000e+00 : f32
    %37 = vector.broadcast %cst_16 : f32 to vector<8x1xf32>
    %38 = arith.subf %37, %36 : vector<8x1xf32>
    %39 = vector.shape_cast %38 : vector<8x1xf32> to vector<1x8x1xf32>
    %cst_17 = arith.constant 0.000000e+00 : f32
    %40 = vector.broadcast %cst_17 : f32 to vector<1x8x1xf32>
    %41 = arith.cmpf ogt, %39, %40 : vector<1x8x1xf32>
    "tpu.trace_start"() <{level = 10 : i32, message = "htd,hkd->htk"}> : () -> ()
    %cst_18 = arith.constant dense<0.000000e+00> : vector<4x8x8xf32>
    %42 = tpu.matmul %9, %10, %cst_18 {dimension_numbers = #tpu.dot_dimension_numbers<[2], [2], [1], [1], [0, 0, 0, 1, 1, 1], [0], [0]>} : vector<4x8x8xf32>, vector<4x8x8xf32>, vector<4x8x8xf32> -> vector<4x8x8xf32>
    "tpu.trace_stop"() : () -> ()
    %43 = vector.shape_cast %21 : vector<8x8xi1> to vector<1x8x8xi1>
    %cst_19 = arith.constant -1.000000e+30 : f32
    %44 = vector.shape_cast %43 : vector<1x8x8xi1> to vector<1x8x8xi1>
    %45 = vector.broadcast %44 : vector<1x8x8xi1> to vector<4x8x8xi1>
    %46 = vector.broadcast %cst_19 : f32 to vector<4x8x8xf32>
    %47 = arith.select %45, %42, %46 : vector<4x8x8xi1>, vector<4x8x8xf32>
    %cst_20 = arith.constant dense<0xFF800000> : vector<4x8xf32>
    %48 = vector.multi_reduction <maximumf>, %47, %cst_20 [2] : vector<4x8x8xf32> to vector<4x8xf32>
    %49 = vector.shape_cast %48 : vector<4x8xf32> to vector<4x8x1xf32>
    %cst_21 = arith.constant 0.000000e+00 : f32
    %50 = vector.broadcast %cst_21 : f32 to vector<4x8x1xf32>
    %51 = arith.maximumf %49, %50 : vector<4x8x1xf32>
    %52 = vector.shape_cast %41 : vector<1x8x1xi1> to vector<1x8x1xi1>
    %53 = vector.broadcast %52 : vector<1x8x1xi1> to vector<4x8x1xi1>
    %54 = arith.select %53, %51, %49 : vector<4x8x1xi1>, vector<4x8x1xf32>
    %55 = vector.broadcast %54 : vector<4x8x1xf32> to vector<4x8x8xf32>
    %56 = arith.subf %47, %55 : vector<4x8x8xf32>
    %57 = math.exp %56 : vector<4x8x8xf32>
    %cst_22 = arith.constant dense<0.000000e+00> : vector<4x8xf32>
    %58 = vector.multi_reduction <add>, %57, %cst_22 [2] : vector<4x8x8xf32> to vector<4x8xf32>
    %59 = vector.shape_cast %58 : vector<4x8xf32> to vector<4x8x1xf32>
    %cst_23 = arith.constant 0.000000e+00 : f32
    %60 = vector.broadcast %cst_23 : f32 to vector<4x8x1xf32>
    %61 = arith.subf %60, %54 : vector<4x8x1xf32>
    %62 = math.exp %61 : vector<4x8x1xf32>
    %63 = vector.broadcast %39 : vector<1x8x1xf32> to vector<4x8x1xf32>
    %64 = arith.mulf %63, %62 : vector<4x8x1xf32>
    %65 = arith.addf %59, %64 : vector<4x8x1xf32>
    %66 = tpu.reciprocal %65 {approx = true} : vector<4x8x1xf32> -> vector<4x8x1xf32>
    %67 = arith.mulf %65, %66 : vector<4x8x1xf32>
    %cst_24 = arith.constant 2.000000e+00 : f32
    %68 = vector.broadcast %cst_24 : f32 to vector<4x8x1xf32>
    %69 = arith.subf %68, %67 : vector<4x8x1xf32>
    %70 = arith.mulf %66, %69 : vector<4x8x1xf32>
    "tpu.trace_start"() <{level = 10 : i32, message = "htk,hkd->htd"}> : () -> ()
    %cst_25 = arith.constant dense<0.000000e+00> : vector<4x8x8xf32>
    %71 = tpu.matmul %57, %11, %cst_25 {dimension_numbers = #tpu.dot_dimension_numbers<[2], [1], [1], [2], [0, 0, 0, 1, 1, 2], [0], [0]>} : vector<4x8x8xf32>, vector<4x8x8xf32>, vector<4x8x8xf32> -> vector<4x8x8xf32>
    "tpu.trace_stop"() : () -> ()
    %72 = vector.broadcast %70 : vector<4x8x1xf32> to vector<4x8x8xf32>
    %73 = arith.mulf %71, %72 : vector<4x8x8xf32>
    %c0_26 = arith.constant 0 : index
    %c0_27 = arith.constant 0 : index
    %74 = vector.load %arg8[%c0_26, %c0_27] : memref<32x32xf32, #tpu.memory_space<vmem>>, vector<32x32xf32>
    %cst_28 = arith.constant 0.000000e+00 : f32
    %75 = vector.broadcast %cst_28 : f32 to vector<8x32xf32>
    %76 = vector.extract_strided_slice %73 {offsets = [0, 0, 0], sizes = [1, 8, 8], strides = [1, 1, 1]} : vector<4x8x8xf32> to vector<1x8x8xf32>
    %77 = vector.shape_cast %76 : vector<1x8x8xf32> to vector<8x8xf32>
    %78 = vector.extract_strided_slice %74 {offsets = [0, 0], sizes = [8, 32], strides = [1, 1]} : vector<32x32xf32> to vector<8x32xf32>
    %cst_29 = arith.constant dense<0.000000e+00> : vector<8x32xf32>
    %79 = tpu.matmul %77, %78, %cst_29 {dimension_numbers = #tpu.dot_dimension_numbers<[1], [0], [0], [1], [0, 0, 1, 1], [], []>} : vector<8x8xf32>, vector<8x32xf32>, vector<8x32xf32> -> vector<8x32xf32>
    %80 = arith.addf %75, %79 : vector<8x32xf32>
    %81 = vector.extract_strided_slice %73 {offsets = [1, 0, 0], sizes = [1, 8, 8], strides = [1, 1, 1]} : vector<4x8x8xf32> to vector<1x8x8xf32>
    %82 = vector.shape_cast %81 : vector<1x8x8xf32> to vector<8x8xf32>
    %83 = vector.extract_strided_slice %74 {offsets = [8, 0], sizes = [8, 32], strides = [1, 1]} : vector<32x32xf32> to vector<8x32xf32>
    %cst_30 = arith.constant dense<0.000000e+00> : vector<8x32xf32>
    %84 = tpu.matmul %82, %83, %cst_30 {dimension_numbers = #tpu.dot_dimension_numbers<[1], [0], [0], [1], [0, 0, 1, 1], [], []>} : vector<8x8xf32>, vector<8x32xf32>, vector<8x32xf32> -> vector<8x32xf32>
    %85 = arith.addf %80, %84 : vector<8x32xf32>
    %86 = vector.extract_strided_slice %73 {offsets = [2, 0, 0], sizes = [1, 8, 8], strides = [1, 1, 1]} : vector<4x8x8xf32> to vector<1x8x8xf32>
    %87 = vector.shape_cast %86 : vector<1x8x8xf32> to vector<8x8xf32>
    %88 = vector.extract_strided_slice %74 {offsets = [16, 0], sizes = [8, 32], strides = [1, 1]} : vector<32x32xf32> to vector<8x32xf32>
    %cst_31 = arith.constant dense<0.000000e+00> : vector<8x32xf32>
    %89 = tpu.matmul %87, %88, %cst_31 {dimension_numbers = #tpu.dot_dimension_numbers<[1], [0], [0], [1], [0, 0, 1, 1], [], []>} : vector<8x8xf32>, vector<8x32xf32>, vector<8x32xf32> -> vector<8x32xf32>
    %90 = arith.addf %85, %89 : vector<8x32xf32>
    %91 = vector.extract_strided_slice %73 {offsets = [3, 0, 0], sizes = [1, 8, 8], strides = [1, 1, 1]} : vector<4x8x8xf32> to vector<1x8x8xf32>
    %92 = vector.shape_cast %91 : vector<1x8x8xf32> to vector<8x8xf32>
    %93 = vector.extract_strided_slice %74 {offsets = [24, 0], sizes = [8, 32], strides = [1, 1]} : vector<32x32xf32> to vector<8x32xf32>
    %cst_32 = arith.constant dense<0.000000e+00> : vector<8x32xf32>
    %94 = tpu.matmul %92, %93, %cst_32 {dimension_numbers = #tpu.dot_dimension_numbers<[1], [0], [0], [1], [0, 0, 1, 1], [], []>} : vector<8x8xf32>, vector<8x32xf32>, vector<8x32xf32> -> vector<8x32xf32>
    %95 = arith.addf %90, %94 : vector<8x32xf32>
    %c0_33 = arith.constant 0 : index
    %c0_34 = arith.constant 0 : index
    %96 = vector.load %arg9[%c0_33, %c0_34] : memref<1x32xf32, #tpu.memory_space<vmem>>, vector<1x32xf32>
    %97 = vector.broadcast %96 : vector<1x32xf32> to vector<8x32xf32>
    %98 = arith.addf %95, %97 : vector<8x32xf32>
    %c0_35 = arith.constant 0 : index
    %c0_36 = arith.constant 0 : index
    %c0_37 = arith.constant 0 : index
    %99 = vector.load %arg10[%c0_35, %c0_36, %c0_37] : memref<1x8x32xf32, #tpu.memory_space<vmem>>, vector<1x8x32xf32>
    %100 = vector.shape_cast %99 : vector<1x8x32xf32> to vector<8x32xf32>
    %101 = vector.shape_cast %98 : vector<8x32xf32> to vector<1x8x32xf32>
    tpu.vector_store %arg10[%c0_35, %c0_36, %c0_37], %101 {strides = array<i32>} : memref<1x8x32xf32, #tpu.memory_space<vmem>>, vector<1x8x32xf32>,
    return
  }
  func.func @transform_0(%arg0: i32, %arg1: i32) -> (i32, i32, i32, i32) {
    %c0_i32 = arith.constant 0 : i32
    %c0_i32_0 = arith.constant 0 : i32
    %c0_i32_1 = arith.constant 0 : i32
    return %arg0, %c0_i32, %arg1, %c0_i32_0 : i32, i32, i32, i32
  }
  func.func @transform_1(%arg0: i32, %arg1: i32) -> (i32, i32, i32, i32) {
    %c0_i32 = arith.constant 0 : i32
    %c0_i32_0 = arith.constant 0 : i32
    %c0_i32_1 = arith.constant 0 : i32
    %c0_i32_2 = arith.constant 0 : i32
    return %arg0, %c0_i32, %c0_i32_0, %c0_i32_1 : i32, i32, i32, i32
  }
  func.func @transform_2(%arg0: i32, %arg1: i32) -> (i32, i32, i32, i32) {
    %c0_i32 = arith.constant 0 : i32
    %c0_i32_0 = arith.constant 0 : i32
    %c0_i32_1 = arith.constant 0 : i32
    %c0_i32_2 = arith.constant 0 : i32
    return %arg0, %c0_i32, %c0_i32_0, %c0_i32_1 : i32, i32, i32, i32
  }
  func.func @transform_3(%arg0: i32, %arg1: i32) -> (i32, i32) {
    %c0_i32 = arith.constant 0 : i32
    %c0_i32_0 = arith.constant 0 : i32
    %c0_i32_1 = arith.constant 0 : i32
    return %c0_i32, %c0_i32_0 : i32, i32
  }
  func.func @transform_4(%arg0: i32, %arg1: i32) -> (i32, i32) {
    %c0_i32 = arith.constant 0 : i32
    %c0_i32_0 = arith.constant 0 : i32
    %c0_i32_1 = arith.constant 0 : i32
    return %c0_i32, %c0_i32_0 : i32, i32
  }
  func.func @transform_5(%arg0: i32, %arg1: i32) -> (i32, i32) {
    %c0_i32 = arith.constant 0 : i32
    %c0_i32_0 = arith.constant 0 : i32
    %c0_i32_1 = arith.constant 0 : i32
    return %c0_i32, %c0_i32_0 : i32, i32
  }
  func.func @transform_6(%arg0: i32, %arg1: i32) -> (i32, i32) {
    %c0_i32 = arith.constant 0 : i32
    %c0_i32_0 = arith.constant 0 : i32
    %c0_i32_1 = arith.constant 0 : i32
    return %c0_i32, %c0_i32_0 : i32, i32
  }
  func.func @transform_7(%arg0: i32, %arg1: i32) -> (i32, i32) {
    %c0_i32 = arith.constant 0 : i32
    %c0_i32_0 = arith.constant 0 : i32
    %c0_i32_1 = arith.constant 0 : i32
    return %c0_i32, %c0_i32_0 : i32, i32
  }
  func.func @transform_8(%arg0: i32, %arg1: i32) -> (i32, i32, i32) {
    %c0_i32 = arith.constant 0 : i32
    %c0_i32_0 = arith.constant 0 : i32
    return %arg0, %arg1, %c0_i32 : i32, i32, i32
  }
}

</mosaic_0001>

<llo_original>
// kernel: tpu_custom_call.1
$region0: #{tpu_custom_call.1}
  #allocation0 [shape = 'u32[]', space=smem, size = 0x4, offset = 0x4, fixed_abs, tag = 'smem constant byte address 0x4 - core index']
  #allocation1 [shape = 'u32[72,128]{1,0:T(1,128)}', space=vmem, size = 0x9000, scoped, tag = 'internal scratch']
  #allocation2 [shape = 'f32[4,8,8]{2,1,0:T(8,128)}', space=vmem, size = 0x4000, scoped, tag = 'scratch operand']
  #allocation3 [shape = 'f32[4,8,8]{2,1,0:T(8,128)}', space=vmem, size = 0x4000, scoped, tag = 'scratch operand']
  %s0 = inlined_call_operand.hbm [shape: f32[2,4,8,8], index: 0, kind: input, shape index: {}]
  %s1 = inlined_call_operand.hbm [shape: f32[2,4,8,8], index: 1, kind: input, shape index: {}]
  %s2 = inlined_call_operand.hbm [shape: f32[2,4,8,8], index: 2, kind: input, shape index: {}]
  %s3 = inlined_call_operand.hbm [shape: f32[8,8], index: 3, kind: input, shape index: {}]
  %s4 = inlined_call_operand.hbm [shape: f32[8,8], index: 4, kind: input, shape index: {}]
  %s5 = inlined_call_operand.hbm [shape: f32[8,8], index: 5, kind: input, shape index: {}]
  %s6 = inlined_call_operand.hbm [shape: f32[32,32], index: 6, kind: input, shape index: {}]
  %s7 = inlined_call_operand.vmem [shape: f32[1,32], index: 7, kind: input, shape index: {}]
  %s8 = inlined_call_operand.hbm [shape: f32[2,8,32], index: 8, kind: output, shape index: {}]
  %s9 = sld [smem:[#allocation0]]
  $region97: #{tpu_custom_call.1} parent=0
    _
  %s11 = ssub.s32 1, %s9
  %s12 = scalar_select 0, %s11, %s9
  $region1: #{tpu_custom_call.1} parent=0
    #allocation4 [shape = 'u8[32768]{0}', space=vmem, size = 0x8000, scoped, tag = 'input window, operand 0']
    #allocation5 [shape = 's32[2]{0}', space=sflag, size = 0x8, scoped, tag = 'scoped memory for tpu_custom_call.1']
    #allocation6 [shape = 's32[2]{0}', space=sflag, size = 0x8, scoped, tag = 'scoped memory for tpu_custom_call.1']
    #allocation7 [shape = 'u8[32768]{0}', space=vmem, size = 0x8000, scoped, tag = 'input window, operand 1']
    #allocation8 [shape = 's32[2]{0}', space=sflag, size = 0x8, scoped, tag = 'scoped memory for tpu_custom_call.1']
    #allocation9 [shape = 'u8[32768]{0}', space=vmem, size = 0x8000, scoped, tag = 'input window, operand 2']
    #allocation10 [shape = 'u8[4096]{0}', space=vmem, size = 0x1000, scoped, tag = 'input window, operand 3, single buffered']
    #allocation11 [shape = 's32[1]{0}', space=sflag, size = 0x4, scoped, tag = 'scoped memory for tpu_custom_call.1']
    #allocation12 [shape = 'u8[4096]{0}', space=vmem, size = 0x1000, scoped, tag = 'input window, operand 4, single buffered']
    #allocation13 [shape = 'u8[4096]{0}', space=vmem, size = 0x1000, scoped, tag = 'input window, operand 5, single buffered']
    #allocation14 [shape = 's32[1]{0}', space=sflag, size = 0x4, scoped, tag = 'scoped memory for tpu_custom_call.1']
    #allocation15 [shape = 'u8[16384]{0}', space=vmem, size = 0x4000, scoped, tag = 'input window, operand 6, single buffered']
    #allocation16 [shape = 'u8[8192]{0}', space=vmem, size = 0x2000, scoped, tag = 'output window, operand 0']
    %13 = vsyncpa [#allocation5], 0
    %s14 = scalar_lea.sflag [#allocation5], 1
    %15 = vsyncpa %s14, 0
    %16 = vsyncpa [#allocation8], 0
    %s17 = scalar_lea.sflag [#allocation8], 1
    %18 = vsyncpa %s17, 0
    %19 = vsyncpa [#allocation11], 0
    %20 = vsyncpa [#allocation14], 0
    %21 = vsyncpa [#allocation6], 0
    %s22 = scalar_lea.sflag [#allocation6], 1
    %23 = vsyncpa %s22, 0
    loop: start=0, step=1, limit=4
    $region2: #{tpu_custom_call.1} parent=1 // loop_pre_header
      _
    $region3: #{tpu_custom_call.1} parent=1 // loop_header
      %s25 = sphi 0, %s29
      %p26 = scmp.ge.s32.totalorder %s25, 4
      %s32 = sphi 0, %s44
      %s33 = sphi 0, %s40
      %s34 = sphi 0, %s32
      %s35 = sphi 0, %s33
      %s36 = sphi 0, %s34
      %s37 = sphi 0, %s35
      %s49 = sphi 0, %s51
      %s52 = sphi 0, %s49
      %s53 = sphi 0, %s52
      %s69 = sphi 0, %s53
      %s75 = sphi 0, %s77
      %s78 = sphi 0, %s75
      %s79 = sphi 0, %s78
      %s95 = sphi 0, %s79
      %s101 = sphi 0, %s103
      %s104 = sphi 0, %s101
      %s105 = sphi 0, %s104
      %s121 = sphi 0, %s105
      %s125 = sphi 0, %s125
      %s127 = sphi 0, %s125
      %s128 = sphi 0, %s127
      %s142 = sphi 0, %s128
      %s146 = sphi 0, %s146
      %s148 = sphi 0, %s146
      %s149 = sphi 0, %s148
      %s163 = sphi 0, %s149
      %s167 = sphi 0, %s167
      %s169 = sphi 0, %s167
      %s170 = sphi 0, %s169
      %s184 = sphi 0, %s170
      %s188 = sphi 0, %s188
      %s190 = sphi 0, %s188
      %s191 = sphi 0, %s190
      %s205 = sphi 0, %s191
      %s209 = sphi 0, %s209
      %s211 = sphi 0, %s209
      %s212 = sphi 0, %s211
      %s226 = sphi 0, %s212
      %s234 = sphi 0, %s236
      %s237 = sphi 0, %s234
      %s238 = sphi 0, %s237
      %s254 = sphi 0, %s238
    $region4: #{tpu_custom_call.1} parent=1 // loop_header_branch
      %28 = sbr.rel (%p26) target = $region8
    $region5: #{tpu_custom_call.1} parent=1 // loop_body
      %s30 = ssub.s32 %s25, 1
      %s31 = ssub.s32 %s25, 2
      %s38 = sadd.s32 1, %s33
      %p39 = scmp.ge.s32.totalorder %s38, 1
      %s40 = scalar_select %p39, 0, %s38
      %s41 = sadd.s32 1, %s32
      %s42 = scalar_select %p39, %s41, %s32
      %p43 = scmp.ge.s32.totalorder %s42, 2
      %s44 = scalar_select %p43, 0, %s42
      %s45 = ssub.s32 %s32, %s44
      %s46 = ssub.s32 %s33, %s40
      %s47 = sor.u32 %s45, %s46
      %p48 = scmp.eq.s32.totalorder %s47, 0
      %s50 = sadd.s32 %s49, 1
      %s51 = scalar_select %p48, %s49, %s50
      %p54 = pneg %p48
      %p55 = scmp.eq.s32.totalorder %s25, 1
      %p56 = por %p54, %p55
      %p57 = scmp.ne.s32.totalorder %s49, %s52
      %p58 = scmp.eq.s32.totalorder %s25, 0
      %p59 = por %p57, %p58
      %p60 = scmp.ne.s32.totalorder %s49, %s52
      %p61 = scmp.eq.s32.totalorder %s30, 1
      %p62 = por %p60, %p61
      %p63 = scmp.ne.s32.totalorder %s52, %s53
      %p64 = scmp.eq.s32.totalorder %s30, 0
      %p65 = por %p63, %p64
      %p66 = scmp.ne.s32.totalorder %s52, %s53
      %p67 = scmp.eq.s32.totalorder %s31, 1
      %p68 = por %p66, %p67
      %p70 = scmp.ne.s32.totalorder %s53, %s69
      %p71 = scmp.eq.s32.totalorder %s31, 0
      %p72 = por %p70, %p71
      %s73 = ssub.s32 %s32, %s44
      %p74 = scmp.eq.s32.totalorder %s73, 0
      %s76 = sadd.s32 %s75, 1
      %s77 = scalar_select %p74, %s75, %s76
      %p80 = pneg %p74
      %p81 = scmp.eq.s32.totalorder %s25, 1
      %p82 = por %p80, %p81
      %p83 = scmp.ne.s32.totalorder %s75, %s78
      %p84 = scmp.eq.s32.totalorder %s25, 0
      %p85 = por %p83, %p84
      %p86 = scmp.ne.s32.totalorder %s75, %s78
      %p87 = scmp.eq.s32.totalorder %s30, 1
      %p88 = por %p86, %p87
      %p89 = scmp.ne.s32.totalorder %s78, %s79
      %p90 = scmp.eq.s32.totalorder %s30, 0
      %p91 = por %p89, %p90
      %p92 = scmp.ne.s32.totalorder %s78, %s79
      %p93 = scmp.eq.s32.totalorder %s31, 1
      %p94 = por %p92, %p93
      %p96 = scmp.ne.s32.totalorder %s79, %s95
      %p97 = scmp.eq.s32.totalorder %s31, 0
      %p98 = por %p96, %p97
      %s99 = ssub.s32 %s32, %s44
      %p100 = scmp.eq.s32.totalorder %s99, 0
      %s102 = sadd.s32 %s101, 1
      %s103 = scalar_select %p100, %s101, %s102
      %p106 = pneg %p100
      %p107 = scmp.eq.s32.totalorder %s25, 1
      %p108 = por %p106, %p107
      %p109 = scmp.ne.s32.totalorder %s101, %s104
      %p110 = scmp.eq.s32.totalorder %s25, 0
      %p111 = por %p109, %p110
      %p112 = scmp.ne.s32.totalorder %s101, %s104
      %p113 = scmp.eq.s32.totalorder %s30, 1
      %p114 = por %p112, %p113
      %p115 = scmp.ne.s32.totalorder %s104, %s105
      %p116 = scmp.eq.s32.totalorder %s30, 0
      %p117 = por %p115, %p116
      %p118 = scmp.ne.s32.totalorder %s104, %s105
      %p119 = scmp.eq.s32.totalorder %s31, 1
      %p120 = por %p118, %p119
      %p122 = scmp.ne.s32.totalorder %s105, %s121
      %p123 = scmp.eq.s32.totalorder %s31, 0
      %p124 = por %p122, %p123
      %s126 = sadd.s32 %s125, 1
      %p129 = scmp.eq.s32.totalorder %s25, 1
      %p130 = scmp.ne.s32.totalorder %s125, %s127
      %p131 = scmp.eq.s32.totalorder %s25, 0
      %p132 = por %p130, %p131
      %p133 = scmp.ne.s32.totalorder %s125, %s127
      %p134 = scmp.eq.s32.totalorder %s30, 1
      %p135 = por %p133, %p134
      %p136 = scmp.ne.s32.totalorder %s127, %s128
      %p137 = scmp.eq.s32.totalorder %s30, 0
      %p138 = por %p136, %p137
      %p139 = scmp.ne.s32.totalorder %s127, %s128
      %p140 = scmp.eq.s32.totalorder %s31, 1
      %p141 = por %p139, %p140
      %p143 = scmp.ne.s32.totalorder %s128, %s142
      %p144 = scmp.eq.s32.totalorder %s31, 0
      %p145 = por %p143, %p144
      %s147 = sadd.s32 %s146, 1
      %p150 = scmp.eq.s32.totalorder %s25, 1
      %p151 = scmp.ne.s32.totalorder %s146, %s148
      %p152 = scmp.eq.s32.totalorder %s25, 0
      %p153 = por %p151, %p152
      %p154 = scmp.ne.s32.totalorder %s146, %s148
      %p155 = scmp.eq.s32.totalorder %s30, 1
      %p156 = por %p154, %p155
      %p157 = scmp.ne.s32.totalorder %s148, %s149
      %p158 = scmp.eq.s32.totalorder %s30, 0
      %p159 = por %p157, %p158
      %p160 = scmp.ne.s32.totalorder %s148, %s149
      %p161 = scmp.eq.s32.totalorder %s31, 1
      %p162 = por %p160, %p161
      %p164 = scmp.ne.s32.totalorder %s149, %s163
      %p165 = scmp.eq.s32.totalorder %s31, 0
      %p166 = por %p164, %p165
      %s168 = sadd.s32 %s167, 1
      %p171 = scmp.eq.s32.totalorder %s25, 1
      %p172 = scmp.ne.s32.totalorder %s167, %s169
      %p173 = scmp.eq.s32.totalorder %s25, 0
      %p174 = por %p172, %p173
      %p175 = scmp.ne.s32.totalorder %s167, %s169
      %p176 = scmp.eq.s32.totalorder %s30, 1
      %p177 = por %p175, %p176
      %p178 = scmp.ne.s32.totalorder %s169, %s170
      %p179 = scmp.eq.s32.totalorder %s30, 0
      %p180 = por %p178, %p179
      %p181 = scmp.ne.s32.totalorder %s169, %s170
      %p182 = scmp.eq.s32.totalorder %s31, 1
      %p183 = por %p181, %p182
      %p185 = scmp.ne.s32.totalorder %s170, %s184
      %p186 = scmp.eq.s32.totalorder %s31, 0
      %p187 = por %p185, %p186
      %s189 = sadd.s32 %s188, 1
      %p192 = scmp.eq.s32.totalorder %s25, 1
      %p193 = scmp.ne.s32.totalorder %s188, %s190
      %p194 = scmp.eq.s32.totalorder %s25, 0
      %p195 = por %p193, %p194
      %p196 = scmp.ne.s32.totalorder %s188, %s190
      %p197 = scmp.eq.s32.totalorder %s30, 1
      %p198 = por %p196, %p197
      %p199 = scmp.ne.s32.totalorder %s190, %s191
      %p200 = scmp.eq.s32.totalorder %s30, 0
      %p201 = por %p199, %p200
      %p202 = scmp.ne.s32.totalorder %s190, %s191
      %p203 = scmp.eq.s32.totalorder %s31, 1
      %p204 = por %p202, %p203
      %p206 = scmp.ne.s32.totalorder %s191, %s205
      %p207 = scmp.eq.s32.totalorder %s31, 0
      %p208 = por %p206, %p207
      %s210 = sadd.s32 %s209, 1
      %p213 = scmp.eq.s32.totalorder %s25, 1
      %p214 = scmp.ne.s32.totalorder %s209, %s211
      %p215 = scmp.eq.s32.totalorder %s25, 0
      %p216 = por %p214, %p215
      %p217 = scmp.ne.s32.totalorder %s209, %s211
      %p218 = scmp.eq.s32.totalorder %s30, 1
      %p219 = por %p217, %p218
      %p220 = scmp.ne.s32.totalorder %s211, %s212
      %p221 = scmp.eq.s32.totalorder %s30, 0
      %p222 = por %p220, %p221
      %p223 = scmp.ne.s32.totalorder %s211, %s212
      %p224 = scmp.eq.s32.totalorder %s31, 1
      %p225 = por %p223, %p224
      %p227 = scmp.ne.s32.totalorder %s212, %s226
      %p228 = scmp.eq.s32.totalorder %s31, 0
      %p229 = por %p227, %p228
      %s230 = ssub.s32 %s32, %s44
      %s231 = ssub.s32 %s33, %s40
      %s232 = sor.u32 %s230, %s231
      %p233 = scmp.eq.s32.totalorder %s232, 0
      %s235 = sadd.s32 %s234, 1
      %s236 = scalar_select %p233, %s234, %s235
      %p239 = pneg %p233
      %p240 = scmp.eq.s32.totalorder %s25, 1
      %p241 = por %p239, %p240
      %p242 = scmp.ne.s32.totalorder %s234, %s237
      %p243 = scmp.eq.s32.totalorder %s25, 0
      %p244 = por %p242, %p243
      %p245 = scmp.ne.s32.totalorder %s234, %s237
      %p246 = scmp.eq.s32.totalorder %s30, 1
      %p247 = por %p245, %p246
      %p248 = scmp.ne.s32.totalorder %s237, %s238
      %p249 = scmp.eq.s32.totalorder %s30, 0
      %p250 = por %p248, %p249
      %p251 = scmp.ne.s32.totalorder %s237, %s238
      %p252 = scmp.eq.s32.totalorder %s31, 1
      %p253 = por %p251, %p252
      %p255 = scmp.ne.s32.totalorder %s238, %s254
      %p256 = scmp.eq.s32.totalorder %s31, 0
      %p257 = por %p255, %p256
      %p258 = scmp.le.s32.totalorder 1, %s25
      %p259 = scmp.lt.s32.totalorder %s25, 3
      %p260 = pnand %p258, %p259
      %p261 = pneg %p260
      // Predicated region
      $region9: #{tpu_custom_call.1} parent=5 // pred_check
        _
      $region10: #{tpu_custom_call.1} parent=5 // pred_check_branch
        %263 = sbr.rel (%p260) target = $region12
      $region11: #{tpu_custom_call.1} parent=5 // pred_region
        %s264 = ssub.s32 %s25, 1
        // Predicated region
        $region13: #{tpu_custom_call.1} parent=11 // pred_check
          %p265 = pneg %p138
        $region14: #{tpu_custom_call.1} parent=11 // pred_check_branch
          %267 = sbr.rel (%p265) target = $region16
        $region15: #{tpu_custom_call.1} parent=11 // pred_region
          %269 = vsyncadd [#allocation11], 0
          %s271 = sshll.u32 %s3, 4
          %s272 = int_to_ptr.hbm [resolvable:$true] %s271
          %s273 = sshll.u32 [#allocation10], 4
          %s274 = int_to_ptr.vmem [resolvable:$true] %s273
          %276 = dma.hbm_to_vmem [thread:$0]  %s272, 128, %s274, [#allocation11]
        $region16: #{tpu_custom_call.1} parent=11 // pred_fallthru
          _
        // Predicated region
        $region17: #{tpu_custom_call.1} parent=11 // pred_check
          %p277 = pneg %p159
        $region18: #{tpu_custom_call.1} parent=11 // pred_check_branch
          %279 = sbr.rel (%p277) target = $region20
        $region19: #{tpu_custom_call.1} parent=11 // pred_region
          %281 = vsyncadd [#allocation11], 0
          %s283 = sshll.u32 %s4, 4
          %s284 = int_to_ptr.hbm [resolvable:$true] %s283
          %s285 = sshll.u32 [#allocation12], 4
          %s286 = int_to_ptr.vmem [resolvable:$true] %s285
          %288 = dma.hbm_to_vmem [thread:$0]  %s284, 128, %s286, [#allocation11]
        $region20: #{tpu_custom_call.1} parent=11 // pred_fallthru
          _
        // Predicated region
        $region21: #{tpu_custom_call.1} parent=11 // pred_check
          %p289 = pneg %p180
        $region22: #{tpu_custom_call.1} parent=11 // pred_check_branch
          %291 = sbr.rel (%p289) target = $region24
        $region23: #{tpu_custom_call.1} parent=11 // pred_region
          %293 = vsyncadd [#allocation14], 0
          %s295 = sshll.u32 %s5, 4
          %s296 = int_to_ptr.hbm [resolvable:$true] %s295
          %s297 = sshll.u32 [#allocation13], 4
          %s298 = int_to_ptr.vmem [resolvable:$true] %s297
          %300 = dma.hbm_to_vmem [thread:$0]  %s296, 128, %s298, [#allocation14]
        $region24: #{tpu_custom_call.1} parent=11 // pred_fallthru
          _
        // Predicated region
        $region25: #{tpu_custom_call.1} parent=11 // pred_check
          %p301 = pneg %p201
        $region26: #{tpu_custom_call.1} parent=11 // pred_check_branch
          %303 = sbr.rel (%p301) target = $region28
        $region27: #{tpu_custom_call.1} parent=11 // pred_region
          %305 = vsyncadd [#allocation14], 0
          %s306 = sshll.u32 %s6, 4
          %s307 = int_to_ptr.hbm [resolvable:$true] %s306
          %s308 = sshll.u32 [#allocation15], 4
          %s309 = int_to_ptr.vmem [resolvable:$true] %s308
          %314 = dma.hbm_to_vmem [thread:$0]  %s307, 512, %s309, [#allocation14], 128, 128, 8
        $region28: #{tpu_custom_call.1} parent=11 // pred_fallthru
          _
        // Predicated region
        $region29: #{tpu_custom_call.1} parent=11 // pred_check
          %p315 = pneg %p222
        $region30: #{tpu_custom_call.1} parent=11 // pred_check_branch
          %317 = sbr.rel (%p315) target = $region32
        $region31: #{tpu_custom_call.1} parent=11 // pred_region
          _
        $region32: #{tpu_custom_call.1} parent=11 // pred_fallthru
          _
      $region12: #{tpu_custom_call.1} parent=5 // pred_fallthru
        _
      %p318 = scmp.lt.s32.totalorder %s25, 2
      // Predicated region
      $region33: #{tpu_custom_call.1} parent=5 // pred_check
        %p319 = pneg %p318
      $region34: #{tpu_custom_call.1} parent=5 // pred_check_branch
        %321 = sbr.rel (%p319) target = $region36
      $region35: #{tpu_custom_call.1} parent=5 // pred_region
        // Predicated region
        $region37: #{tpu_custom_call.1} parent=35 // pred_check
          %p322 = pneg %p59
        $region38: #{tpu_custom_call.1} parent=35 // pred_check_branch
          %324 = sbr.rel (%p322) target = $region40
        $region39: #{tpu_custom_call.1} parent=35 // pred_region
          %s325 = sand.u32 %s49, 1
          %s326 = scalar_lea.sflag [#allocation5], %s325
          %s327 = sand.u32 %s49, 1
          %s328 = smul.addr %s327, 32
          %s329 = scalar_lea.vmem [#allocation4], %s328
          %331 = vsyncadd %s326, 0
          %s332 = smul.addr %s32, 4
          %s333 = sadd.s32 %s33, %s332
          %s334 = smul.addr %s333, 8
          %s335 = scalar_lea.hbm %s0, %s334
          %s336 = sshll.u32 %s335, 4
          %s337 = int_to_ptr.hbm [resolvable:$true] %s336
          %s338 = sshll.u32 %s329, 4
          %s339 = int_to_ptr.vmem [resolvable:$true] %s338
          %344 = dma.hbm_to_vmem [thread:$0]  %s337, 512, %s339, %s326, 128, 128, 8
        $region40: #{tpu_custom_call.1} parent=35 // pred_fallthru
          _
        // Predicated region
        $region41: #{tpu_custom_call.1} parent=35 // pred_check
          %p345 = pneg %p85
        $region42: #{tpu_custom_call.1} parent=35 // pred_check_branch
          %347 = sbr.rel (%p345) target = $region44
        $region43: #{tpu_custom_call.1} parent=35 // pred_region
          %s348 = sand.u32 %s25, 1
          %s349 = scalar_lea.sflag [#allocation8], %s348
          %s350 = sand.u32 %s75, 1
          %s351 = smul.addr %s350, 32
          %s352 = scalar_lea.vmem [#allocation7], %s351
          %354 = vsyncadd %s349, 0
          %s355 = smul.addr %s32, 4
          %s356 = smul.addr %s355, 8
          %s357 = scalar_lea.hbm %s1, %s356
          %s358 = sshll.u32 %s357, 4
          %s359 = int_to_ptr.hbm [resolvable:$true] %s358
          %s360 = sshll.u32 %s352, 4
          %s361 = int_to_ptr.vmem [resolvable:$true] %s360
          %366 = dma.hbm_to_vmem [thread:$0]  %s359, 512, %s361, %s349, 128, 128, 8
        $region44: #{tpu_custom_call.1} parent=35 // pred_fallthru
          _
        // Predicated region
        $region45: #{tpu_custom_call.1} parent=35 // pred_check
          %p367 = pneg %p111
        $region46: #{tpu_custom_call.1} parent=35 // pred_check_branch
          %369 = sbr.rel (%p367) target = $region48
        $region47: #{tpu_custom_call.1} parent=35 // pred_region
          %s370 = sand.u32 %s25, 1
          %s371 = scalar_lea.sflag [#allocation8], %s370
          %s372 = sand.u32 %s101, 1
          %s373 = smul.addr %s372, 32
          %s374 = scalar_lea.vmem [#allocation9], %s373
          %376 = vsyncadd %s371, 0
          %s377 = smul.addr %s32, 4
          %s378 = smul.addr %s377, 8
          %s379 = scalar_lea.hbm %s2, %s378
          %s380 = sshll.u32 %s379, 4
          %s381 = int_to_ptr.hbm [resolvable:$true] %s380
          %s382 = sshll.u32 %s374, 4
          %s383 = int_to_ptr.vmem [resolvable:$true] %s382
          %388 = dma.hbm_to_vmem [thread:$0]  %s381, 512, %s383, %s371, 128, 128, 8
        $region48: #{tpu_custom_call.1} parent=35 // pred_fallthru
          _
      $region36: #{tpu_custom_call.1} parent=5 // pred_fallthru
        _
      %p389 = scmp.le.s32.totalorder 1, %s25
      %p390 = scmp.lt.s32.totalorder %s25, 3
      %p391 = pnand %p389, %p390
      %p392 = pneg %p391
      // Predicated region
      $region49: #{tpu_custom_call.1} parent=5 // pred_check
        _
      $region50: #{tpu_custom_call.1} parent=5 // pred_check_branch
        %394 = sbr.rel (%p391) target = $region52
      $region51: #{tpu_custom_call.1} parent=5 // pred_region
        %s395 = ssub.s32 %s25, 1
        %s396 = sand.u32 %s52, 1
        %s397 = scalar_lea.sflag [#allocation5], %s396
        %s398 = sand.u32 %s52, 1
        %s399 = smul.addr %s398, 32
        %s400 = scalar_lea.vmem [#allocation4], %s399
        // Predicated region
        $region53: #{tpu_custom_call.1} parent=51 // pred_check
          %p401 = pneg %p65
        $region54: #{tpu_custom_call.1} parent=51 // pred_check_branch
          %403 = sbr.rel (%p401) target = $region56
        $region55: #{tpu_custom_call.1} parent=51 // pred_region
          %405 = dma.done %s397, 512
        $region56: #{tpu_custom_call.1} parent=51 // pred_fallthru
          _
        %s406 = sand.u32 %s30, 1
        %s407 = scalar_lea.sflag [#allocation8], %s406
        %s408 = sand.u32 %s78, 1
        %s409 = smul.addr %s408, 32
        %s410 = scalar_lea.vmem [#allocation7], %s409
        // Predicated region
        $region57: #{tpu_custom_call.1} parent=51 // pred_check
          %p411 = pneg %p91
        $region58: #{tpu_custom_call.1} parent=51 // pred_check_branch
          %413 = sbr.rel (%p411) target = $region60
        $region59: #{tpu_custom_call.1} parent=51 // pred_region
          %415 = dma.done %s407, 512
        $region60: #{tpu_custom_call.1} parent=51 // pred_fallthru
          _
        %s416 = sand.u32 %s30, 1
        %s417 = scalar_lea.sflag [#allocation8], %s416
        %s418 = sand.u32 %s104, 1
        %s419 = smul.addr %s418, 32
        %s420 = scalar_lea.vmem [#allocation9], %s419
        // Predicated region
        $region61: #{tpu_custom_call.1} parent=51 // pred_check
          %p421 = pneg %p117
        $region62: #{tpu_custom_call.1} parent=51 // pred_check_branch
          %423 = sbr.rel (%p421) target = $region64
        $region63: #{tpu_custom_call.1} parent=51 // pred_region
          %425 = dma.done %s417, 512
        $region64: #{tpu_custom_call.1} parent=51 // pred_fallthru
          _
        // Predicated region
        $region65: #{tpu_custom_call.1} parent=51 // pred_check
          %p426 = pneg %p138
        $region66: #{tpu_custom_call.1} parent=51 // pred_check_branch
          %428 = sbr.rel (%p426) target = $region68
        $region67: #{tpu_custom_call.1} parent=51 // pred_region
          %430 = dma.done [#allocation11], 128
        $region68: #{tpu_custom_call.1} parent=51 // pred_fallthru
          _
        // Predicated region
        $region69: #{tpu_custom_call.1} parent=51 // pred_check
          %p431 = pneg %p159
        $region70: #{tpu_custom_call.1} parent=51 // pred_check_branch
          %433 = sbr.rel (%p431) target = $region72
        $region71: #{tpu_custom_call.1} parent=51 // pred_region
          %435 = dma.done [#allocation11], 128
        $region72: #{tpu_custom_call.1} parent=51 // pred_fallthru
          _
        // Predicated region
        $region73: #{tpu_custom_call.1} parent=51 // pred_check
          %p436 = pneg %p180
        $region74: #{tpu_custom_call.1} parent=51 // pred_check_branch
          %438 = sbr.rel (%p436) target = $region76
        $region75: #{tpu_custom_call.1} parent=51 // pred_region
          %440 = dma.done [#allocation14], 128
        $region76: #{tpu_custom_call.1} parent=51 // pred_fallthru
          _
        // Predicated region
        $region77: #{tpu_custom_call.1} parent=51 // pred_check
          %p441 = pneg %p201
        $region78: #{tpu_custom_call.1} parent=51 // pred_check_branch
          %443 = sbr.rel (%p441) target = $region80
        $region79: #{tpu_custom_call.1} parent=51 // pred_region
          %445 = dma.done [#allocation14], 512
        $region80: #{tpu_custom_call.1} parent=51 // pred_fallthru
          _
        %s446 = sand.u32 %s52, 1
        %s447 = scalar_lea.sflag [#allocation5], %s446
        %s448 = sand.u32 %s52, 1
        %s449 = smul.addr %s448, 32
        %s450 = scalar_lea.vmem [#allocation4], %s449
        %p451 = pneg %p65
        %p452 = pneg %p62
        %s453 = sand.u32 %s30, 1
        %s454 = scalar_lea.sflag [#allocation8], %s453
        %s455 = sand.u32 %s78, 1
        %s456 = smul.addr %s455, 32
        %s457 = scalar_lea.vmem [#allocation7], %s456
        %p458 = pneg %p91
        %p459 = pneg %p88
        %s460 = sand.u32 %s30, 1
        %s461 = scalar_lea.sflag [#allocation8], %s460
        %s462 = sand.u32 %s104, 1
        %s463 = smul.addr %s462, 32
        %s464 = scalar_lea.vmem [#allocation9], %s463
        %p465 = pneg %p117
        %p466 = pneg %p114
        %p467 = pneg %p138
        %p468 = pneg %p135
        %p469 = pneg %p159
        %p470 = pneg %p156
        %p471 = pneg %p180
        %p472 = pneg %p177
        %p473 = pneg %p201
        %p474 = pneg %p198
        %p475 = pneg %p222
        %p476 = pneg %p219
        %p477 = pneg %p250
        %p478 = pneg %p247
        %s479 = sand.u32 %s237, 1
        %s480 = scalar_lea.sflag [#allocation6], %s479
        %s481 = sand.u32 %s237, 1
        %s482 = smul.addr %s481, 8
        %s483 = scalar_lea.vmem [#allocation16], %s482
        %s484 = smul.u32 %s35, 8
        %p485 = scmp.eq.s32.totalorder %s35, 0
        // Predicated region
        $region81: #{tpu_custom_call.1} parent=51 // pred_check
          %p486 = pneg %p485
        $region82: #{tpu_custom_call.1} parent=51 // pred_check_branch
          %488 = sbr.rel (%p486) target = $region84
        $region83: #{tpu_custom_call.1} parent=51 // pred_region
          %v489 = vld [vmem:[%s410] sm:$0xff]
          %v490 = vld [vmem:[%s410 + $0x8] sm:$0xff]
          %v491 = vld [vmem:[%s410 + $0x10] sm:$0xff]
          %v492 = vld [vmem:[%s410 + $0x18] sm:$0xff]
          %v493 = vld [vmem:[%s420] sm:$0xff]
          %v494 = vld [vmem:[%s420 + $0x8] sm:$0xff]
          %v495 = vld [vmem:[%s420 + $0x10] sm:$0xff]
          %v496 = vld [vmem:[%s420 + $0x18] sm:$0xff]
          %v497 = vld [vmem:[#allocation12] sm:$0xff]
          %vm498 = vcmask 64512
          %v500 = vsel %vm498, %v489, 0
          %v503 = vsel %vm498, %v490, 0
          %v506 = vsel %vm498, %v491, 0
          %v509 = vsel %vm498, %v492, 0
          %511 = vmatpush.msra.mxu0 0.0
          %512 = vmatpush.msra.mxu0 0.0
          %513 = vmatpush.msra.mxu0 0.0
          %514 = vmatpush.msra.mxu0 0.0
          %515 = vmatpush.msra.mxu0 0.0
          %516 = vmatpush.msra.mxu0 0.0
          %517 = vmatpush.msra.mxu0 0.0
          %518 = vmatpush.msra.mxu0 0.0
          %519 = vmatpush.msra.mxu0 0.0
          %520 = vmatpush.msra.mxu0 0.0
          %521 = vmatpush.msra.mxu0 0.0
          %522 = vmatpush.msra.mxu0 0.0
          %523 = vmatpush.msra.mxu0 0.0
          %524 = vmatpush.msra.mxu0 0.0
          %525 = vmatpush.msra.mxu0 0.0
          %526 = vmatpush.msra.mxu0 %v497
          %527 = vmatmul.f32.gmra.mxu0 %v500
          %v528 = vpop.f32.mrf.mxu0
          %v529 = vadd.f32 0.0, %v528
          %530 = vmatmul.f32.gmra.mxu0 %v503
          %v531 = vpop.f32.mrf.mxu0
          %v532 = vadd.f32 0.0, %v531
          %533 = vmatmul.f32.gmra.mxu0 %v506
          %v534 = vpop.f32.mrf.mxu0
          %v535 = vadd.f32 0.0, %v534
          %536 = vmatmul.f32.gmra.mxu0 %v509
          %v537 = vpop.f32.mrf.mxu0
          %v538 = vadd.f32 0.0, %v537
          %539 = vdwg.mxu0
          %540 = vst.msk [vmem:[#allocation2] sm:$0xff] %vm498, %v529
          %541 = vst.msk [vmem:[#allocation2 + $0x8] sm:$0xff] %vm498, %v532
          %542 = vst.msk [vmem:[#allocation2 + $0x10] sm:$0xff] %vm498, %v535
          %543 = vst.msk [vmem:[#allocation2 + $0x18] sm:$0xff] %vm498, %v538
          %v544 = vld [vmem:[#allocation13] sm:$0xff]
          %v546 = vsel %vm498, %v493, 0
          %v549 = vsel %vm498, %v494, 0
          %v552 = vsel %vm498, %v495, 0
          %v555 = vsel %vm498, %v496, 0
          %557 = vmatpush.msra.mxu0 0.0
          %558 = vmatpush.msra.mxu0 0.0
          %559 = vmatpush.msra.mxu0 0.0
          %560 = vmatpush.msra.mxu0 0.0
          %561 = vmatpush.msra.mxu0 0.0
          %562 = vmatpush.msra.mxu0 0.0
          %563 = vmatpush.msra.mxu0 0.0
          %564 = vmatpush.msra.mxu0 0.0
          %565 = vmatpush.msra.mxu0 0.0
          %566 = vmatpush.msra.mxu0 0.0
          %567 = vmatpush.msra.mxu0 0.0
          %568 = vmatpush.msra.mxu0 0.0
          %569 = vmatpush.msra.mxu0 0.0
          %570 = vmatpush.msra.mxu0 0.0
          %571 = vmatpush.msra.mxu0 0.0
          %572 = vmatpush.msra.mxu0 %v544
          %573 = vmatmul.f32.gmra.mxu0 %v546
          %v574 = vpop.f32.mrf.mxu0
          %v575 = vadd.f32 0.0, %v574
          %576 = vmatmul.f32.gmra.mxu0 %v549
          %v577 = vpop.f32.mrf.mxu0
          %v578 = vadd.f32 0.0, %v577
          %579 = vmatmul.f32.gmra.mxu0 %v552
          %v580 = vpop.f32.mrf.mxu0
          %v581 = vadd.f32 0.0, %v580
          %582 = vmatmul.f32.gmra.mxu0 %v555
          %v583 = vpop.f32.mrf.mxu0
          %v584 = vadd.f32 0.0, %v583
          %585 = vdwg.mxu0
          %586 = vst.msk [vmem:[#allocation3] sm:$0xff] %vm498, %v575
          %587 = vst.msk [vmem:[#allocation3 + $0x8] sm:$0xff] %vm498, %v578
          %588 = vst.msk [vmem:[#allocation3 + $0x10] sm:$0xff] %vm498, %v581
          %589 = vst.msk [vmem:[#allocation3 + $0x18] sm:$0xff] %vm498, %v584
        $region84: #{tpu_custom_call.1} parent=51 // pred_fallthru
          _
        %v590 = vld [vmem:[%s400] sm:$0xff]
        %v591 = vld [vmem:[%s400 + $0x8] sm:$0xff]
        %v592 = vld [vmem:[%s400 + $0x10] sm:$0xff]
        %v593 = vld [vmem:[%s400 + $0x18] sm:$0xff]
        %v594 = vld [vmem:[#allocation10] sm:$0xff]
        %vm595 = vcmask 64512
        %v597 = vsel %vm595, %v590, 0
        %v600 = vsel %vm595, %v591, 0
        %v603 = vsel %vm595, %v592, 0
        %v606 = vsel %vm595, %v593, 0
        %608 = vmatpush.msra.mxu0 0.0
        %609 = vmatpush.msra.mxu0 0.0
        %610 = vmatpush.msra.mxu0 0.0
        %611 = vmatpush.msra.mxu0 0.0
        %612 = vmatpush.msra.mxu0 0.0
        %613 = vmatpush.msra.mxu0 0.0
        %614 = vmatpush.msra.mxu0 0.0
        %615 = vmatpush.msra.mxu0 0.0
        %616 = vmatpush.msra.mxu0 0.0
        %617 = vmatpush.msra.mxu0 0.0
        %618 = vmatpush.msra.mxu0 0.0
        %619 = vmatpush.msra.mxu0 0.0
        %620 = vmatpush.msra.mxu0 0.0
        %621 = vmatpush.msra.mxu0 0.0
        %622 = vmatpush.msra.mxu0 0.0
        %623 = vmatpush.msra.mxu0 %v594
        %624 = vmatmul.f32.gmra.mxu0 %v597
        %v625 = vpop.f32.mrf.mxu0
        %v626 = vadd.f32 0.0, %v625
        %627 = vmatmul.f32.gmra.mxu0 %v600
        %v628 = vpop.f32.mrf.mxu0
        %v629 = vadd.f32 0.0, %v628
        %630 = vmatmul.f32.gmra.mxu0 %v603
        %v631 = vpop.f32.mrf.mxu0
        %v632 = vadd.f32 0.0, %v631
        %633 = vmatmul.f32.gmra.mxu0 %v606
        %v634 = vpop.f32.mrf.mxu0
        %v635 = vadd.f32 0.0, %v634
        %636 = vdwg.mxu0
        %v637 = vld [vmem:[#allocation2] sm:$0xff]
        %v638 = vld [vmem:[#allocation2 + $0x8] sm:$0xff]
        %v639 = vld [vmem:[#allocation2 + $0x10] sm:$0xff]
        %v640 = vld [vmem:[#allocation2 + $0x18] sm:$0xff]
        %v641 = vld [vmem:[#allocation3] sm:$0xff]
        %v642 = vld [vmem:[#allocation3 + $0x8] sm:$0xff]
        %v643 = vld [vmem:[#allocation3 + $0x10] sm:$0xff]
        %v644 = vld [vmem:[#allocation3 + $0x18] sm:$0xff]
        %v645 = vlaneseq
        %v646 = vshrl.u32 %v645, 7
        %v647 = vstv %s484
        %v648 = vadd.s32 %v647, %v646
        %v649 = vlaneseq
        %v650 = vand.u32 %v649, 127
        %v651 = vsub.s32 %v648, %v650
        %vm652 = vcmp.lt.s32.totalorder %v651, 0
        %v653 = vsub.s32 0, %v651
        %v654 = vsel %vm652, %v653, %v651
        %vm655 = vcmp.le.s32.totalorder %v654, 2
        %v656 = vadd.s32 %v648, 2
        %vm657 = vcmp.lt.s32.totalorder %v656, 7
        %v658 = vsel %vm657, %v656, 7
        %v659 = vsub.s32 %v648, 2
        %vm660 = vcmp.gt.s32.totalorder %v659, 0
        %v661 = vsel %vm660, %v659, 0
        %v662 = vsub.s32 %v658, %v661
        %v663 = vadd.s32 %v662, 1
        %v664 = vcvt.s32.f32 %v663
        %v665 = vsub.f32 5.0, %v664
        %vm666 = vcmp.gt.f32.partialorder %v665, 0.0
        %v668 = vsel %vm595, %v626, 0
        %v671 = vsel %vm595, %v637, 0
        %673 = vmatpush.xpose.msra.mxu0 0.0
        %674 = vmatpush.xpose.msra.mxu0 0.0
        %675 = vmatpush.xpose.msra.mxu0 0.0
        %676 = vmatpush.xpose.msra.mxu0 0.0
        %677 = vmatpush.xpose.msra.mxu0 0.0
        %678 = vmatpush.xpose.msra.mxu0 0.0
        %679 = vmatpush.xpose.msra.mxu0 0.0
        %680 = vmatpush.xpose.msra.mxu0 0.0
        %681 = vmatpush.xpose.msra.mxu0 0.0
        %682 = vmatpush.xpose.msra.mxu0 0.0
        %683 = vmatpush.xpose.msra.mxu0 0.0
        %684 = vmatpush.xpose.msra.mxu0 0.0
        %685 = vmatpush.xpose.msra.mxu0 0.0
        %686 = vmatpush.xpose.msra.mxu0 0.0
        %687 = vmatpush.xpose.msra.mxu0 0.0
        %688 = vmatpush.xpose.msra.mxu0 %v671
        %689 = vmatmul.f32.gmra.mxu0 %v668
        %v690 = vpop.f32.mrf.mxu0
        %v691 = vadd.f32 0.0, %v690
        %692 = vdwg.mxu0
        %v694 = vsel %vm595, %v629, 0
        %v697 = vsel %vm595, %v638, 0
        %699 = vmatpush.xpose.msra.mxu0 0.0
        %700 = vmatpush.xpose.msra.mxu0 0.0
        %701 = vmatpush.xpose.msra.mxu0 0.0
        %702 = vmatpush.xpose.msra.mxu0 0.0
        %703 = vmatpush.xpose.msra.mxu0 0.0
        %704 = vmatpush.xpose.msra.mxu0 0.0
        %705 = vmatpush.xpose.msra.mxu0 0.0
        %706 = vmatpush.xpose.msra.mxu0 0.0
        %707 = vmatpush.xpose.msra.mxu0 0.0
        %708 = vmatpush.xpose.msra.mxu0 0.0
        %709 = vmatpush.xpose.msra.mxu0 0.0
        %710 = vmatpush.xpose.msra.mxu0 0.0
        %711 = vmatpush.xpose.msra.mxu0 0.0
        %712 = vmatpush.xpose.msra.mxu0 0.0
        %713 = vmatpush.xpose.msra.mxu0 0.0
        %714 = vmatpush.xpose.msra.mxu0 %v697
        %715 = vmatmul.f32.gmra.mxu0 %v694
        %v716 = vpop.f32.mrf.mxu0
        %v717 = vadd.f32 0.0, %v716
        %718 = vdwg.mxu0
        %v720 = vsel %vm595, %v632, 0
        %v723 = vsel %vm595, %v639, 0
        %725 = vmatpush.xpose.msra.mxu0 0.0
        %726 = vmatpush.xpose.msra.mxu0 0.0
        %727 = vmatpush.xpose.msra.mxu0 0.0
        %728 = vmatpush.xpose.msra.mxu0 0.0
        %729 = vmatpush.xpose.msra.mxu0 0.0
        %730 = vmatpush.xpose.msra.mxu0 0.0
        %731 = vmatpush.xpose.msra.mxu0 0.0
        %732 = vmatpush.xpose.msra.mxu0 0.0
        %733 = vmatpush.xpose.msra.mxu0 0.0
        %734 = vmatpush.xpose.msra.mxu0 0.0
        %735 = vmatpush.xpose.msra.mxu0 0.0
        %736 = vmatpush.xpose.msra.mxu0 0.0
        %737 = vmatpush.xpose.msra.mxu0 0.0
        %738 = vmatpush.xpose.msra.mxu0 0.0
        %739 = vmatpush.xpose.msra.mxu0 0.0
        %740 = vmatpush.xpose.msra.mxu0 %v723
        %741 = vmatmul.f32.gmra.mxu0 %v720
        %v742 = vpop.f32.mrf.mxu0
        %v743 = vadd.f32 0.0, %v742
        %744 = vdwg.mxu0
        %v746 = vsel %vm595, %v635, 0
        %v749 = vsel %vm595, %v640, 0
        %751 = vmatpush.xpose.msra.mxu0 0.0
        %752 = vmatpush.xpose.msra.mxu0 0.0
        %753 = vmatpush.xpose.msra.mxu0 0.0
        %754 = vmatpush.xpose.msra.mxu0 0.0
        %755 = vmatpush.xpose.msra.mxu0 0.0
        %756 = vmatpush.xpose.msra.mxu0 0.0
        %757 = vmatpush.xpose.msra.mxu0 0.0
        %758 = vmatpush.xpose.msra.mxu0 0.0
        %759 = vmatpush.xpose.msra.mxu0 0.0
        %760 = vmatpush.xpose.msra.mxu0 0.0
        %761 = vmatpush.xpose.msra.mxu0 0.0
        %762 = vmatpush.xpose.msra.mxu0 0.0
        %763 = vmatpush.xpose.msra.mxu0 0.0
        %764 = vmatpush.xpose.msra.mxu0 0.0
        %765 = vmatpush.xpose.msra.mxu0 0.0
        %766 = vmatpush.xpose.msra.mxu0 %v749
        %767 = vmatmul.f32.gmra.mxu0 %v746
        %v768 = vpop.f32.mrf.mxu0
        %v769 = vadd.f32 0.0, %v768
        %770 = vdwg.mxu0
        %v771 = vsel %vm655, 1, 0
        %vm772 = vcmp.eq.s32.totalorder %v771, 1
        %v773 = vsel %vm772, %v691, -1e+30
        %v774 = vsel %vm772, %v717, -1e+30
        %v775 = vsel %vm772, %v743, -1e+30
        %v776 = vsel %vm772, %v769, -1e+30
        %v777 = vsel %vm595, %v773, -inf
        %778 = vmax.xlane.f32.xlu0 %v777
        %v779 = vpop.xlane.xlu0 %778
        %v780 = vsel %vm595, %v774, -inf
        %781 = vmax.xlane.f32.xlu0 %v780
        %v782 = vpop.xlane.xlu0 %781
        %v783 = vsel %vm595, %v775, -inf
        %784 = vmax.xlane.f32.xlu0 %v783
        %v785 = vpop.xlane.xlu0 %784
        %v786 = vsel %vm595, %v776, -inf
        %787 = vmax.xlane.f32.xlu0 %v786
        %v788 = vpop.xlane.xlu0 %787
        %v789 = vmax.f32 %v779, 0.0
        %v790 = vmax.f32 %v782, 0.0
        %v791 = vmax.f32 %v785, 0.0
        %v792 = vmax.f32 %v788, 0.0
        %v793 = vsel %vm666, 1, 0
        %vm794 = vcmp.eq.s32.totalorder %v793, 1
        %v795 = vsel %vm794, %v789, %v779
        %v796 = vsel %vm794, %v790, %v782
        %v797 = vsel %vm794, %v791, %v785
        %v798 = vsel %vm794, %v792, %v788
        %v799 = vsub.f32 %v773, %v795
        %v800 = vsub.f32 %v774, %v796
        %v801 = vsub.f32 %v775, %v797
        %v802 = vsub.f32 %v776, %v798
        %v803 = vmul.f32 %v799, 1.442695
        %v804 = vpow.pop %v803
        %v805 = vmul.f32 %v800, 1.442695
        %v806 = vpow.pop %v805
        %v807 = vmul.f32 %v801, 1.442695
        %v808 = vpow.pop %v807
        %v809 = vmul.f32 %v802, 1.442695
        %v810 = vpow.pop %v809
        %v811 = vsel %vm595, %v804, 0.0
        %812 = vadd.xlane.f32.xlu0 %v811
        %v813 = vpop.xlane.xlu0 %812
        %v814 = vsel %vm595, %v806, 0.0
        %815 = vadd.xlane.f32.xlu0 %v814
        %v816 = vpop.xlane.xlu0 %815
        %v817 = vsel %vm595, %v808, 0.0
        %818 = vadd.xlane.f32.xlu0 %v817
        %v819 = vpop.xlane.xlu0 %818
        %v820 = vsel %vm595, %v810, 0.0
        %821 = vadd.xlane.f32.xlu0 %v820
        %v822 = vpop.xlane.xlu0 %821
        %v823 = vsub.f32 0.0, %v795
        %v824 = vsub.f32 0.0, %v796
        %v825 = vsub.f32 0.0, %v797
        %v826 = vsub.f32 0.0, %v798
        %v827 = vmul.f32 %v823, 1.442695
        %v828 = vpow.pop %v827
        %v829 = vmul.f32 %v824, 1.442695
        %v830 = vpow.pop %v829
        %v831 = vmul.f32 %v825, 1.442695
        %v832 = vpow.pop %v831
        %v833 = vmul.f32 %v826, 1.442695
        %v834 = vpow.pop %v833
        %v835 = vmul.f32 %v665, %v828
        %v836 = vmul.f32 %v665, %v830
        %v837 = vmul.f32 %v665, %v832
        %v838 = vmul.f32 %v665, %v834
        %v839 = vadd.f32 %v813, %v835
        %v840 = vadd.f32 %v816, %v836
        %v841 = vadd.f32 %v819, %v837
        %v842 = vadd.f32 %v822, %v838
        %v843 = vrcp.pop %v839
        %v844 = vrcp.pop %v840
        %v845 = vrcp.pop %v841
        %v846 = vrcp.pop %v842
        %v847 = vmul.f32 %v839, %v843
        %v848 = vmul.f32 %v840, %v844
        %v849 = vmul.f32 %v841, %v845
        %v850 = vmul.f32 %v842, %v846
        %v851 = vsub.f32 2.0, %v847
        %v852 = vsub.f32 2.0, %v848
        %v853 = vsub.f32 2.0, %v849
        %v854 = vsub.f32 2.0, %v850
        %v855 = vmul.f32 %v843, %v851
        %v856 = vmul.f32 %v844, %v852
        %v857 = vmul.f32 %v845, %v853
        %v858 = vmul.f32 %v846, %v854
        %v860 = vsel %vm595, %v804, 0
        %862 = vmatpush.msra.mxu0 0.0
        %863 = vmatpush.msra.mxu0 0.0
        %864 = vmatpush.msra.mxu0 0.0
        %865 = vmatpush.msra.mxu0 0.0
        %866 = vmatpush.msra.mxu0 0.0
        %867 = vmatpush.msra.mxu0 0.0
        %868 = vmatpush.msra.mxu0 0.0
        %869 = vmatpush.msra.mxu0 0.0
        %870 = vmatpush.msra.mxu0 0.0
        %871 = vmatpush.msra.mxu0 0.0
        %872 = vmatpush.msra.mxu0 0.0
        %873 = vmatpush.msra.mxu0 0.0
        %874 = vmatpush.msra.mxu0 0.0
        %875 = vmatpush.msra.mxu0 0.0
        %876 = vmatpush.msra.mxu0 0.0
        %877 = vmatpush.msra.mxu0 %v641
        %878 = vmatmul.f32.gmra.mxu0 %v860
        %v879 = vpop.f32.mrf.mxu0
        %v880 = vadd.f32 0.0, %v879
        %881 = vdwg.mxu0
        %v883 = vsel %vm595, %v806, 0
        %885 = vmatpush.msra.mxu0 0.0
        %886 = vmatpush.msra.mxu0 0.0
        %887 = vmatpush.msra.mxu0 0.0
        %888 = vmatpush.msra.mxu0 0.0
        %889 = vmatpush.msra.mxu0 0.0
        %890 = vmatpush.msra.mxu0 0.0
        %891 = vmatpush.msra.mxu0 0.0
        %892 = vmatpush.msra.mxu0 0.0
        %893 = vmatpush.msra.mxu0 0.0
        %894 = vmatpush.msra.mxu0 0.0
        %895 = vmatpush.msra.mxu0 0.0
        %896 = vmatpush.msra.mxu0 0.0
        %897 = vmatpush.msra.mxu0 0.0
        %898 = vmatpush.msra.mxu0 0.0
        %899 = vmatpush.msra.mxu0 0.0
        %900 = vmatpush.msra.mxu0 %v642
        %901 = vmatmul.f32.gmra.mxu0 %v883
        %v902 = vpop.f32.mrf.mxu0
        %v903 = vadd.f32 0.0, %v902
        %904 = vdwg.mxu0
        %v906 = vsel %vm595, %v808, 0
        %908 = vmatpush.msra.mxu0 0.0
        %909 = vmatpush.msra.mxu0 0.0
        %910 = vmatpush.msra.mxu0 0.0
        %911 = vmatpush.msra.mxu0 0.0
        %912 = vmatpush.msra.mxu0 0.0
        %913 = vmatpush.msra.mxu0 0.0
        %914 = vmatpush.msra.mxu0 0.0
        %915 = vmatpush.msra.mxu0 0.0
        %916 = vmatpush.msra.mxu0 0.0
        %917 = vmatpush.msra.mxu0 0.0
        %918 = vmatpush.msra.mxu0 0.0
        %919 = vmatpush.msra.mxu0 0.0
        %920 = vmatpush.msra.mxu0 0.0
        %921 = vmatpush.msra.mxu0 0.0
        %922 = vmatpush.msra.mxu0 0.0
        %923 = vmatpush.msra.mxu0 %v643
        %924 = vmatmul.f32.gmra.mxu0 %v906
        %v925 = vpop.f32.mrf.mxu0
        %v926 = vadd.f32 0.0, %v925
        %927 = vdwg.mxu0
        %v929 = vsel %vm595, %v810, 0
        %931 = vmatpush.msra.mxu0 0.0
        %932 = vmatpush.msra.mxu0 0.0
        %933 = vmatpush.msra.mxu0 0.0
        %934 = vmatpush.msra.mxu0 0.0
        %935 = vmatpush.msra.mxu0 0.0
        %936 = vmatpush.msra.mxu0 0.0
        %937 = vmatpush.msra.mxu0 0.0
        %938 = vmatpush.msra.mxu0 0.0
        %939 = vmatpush.msra.mxu0 0.0
        %940 = vmatpush.msra.mxu0 0.0
        %941 = vmatpush.msra.mxu0 0.0
        %942 = vmatpush.msra.mxu0 0.0
        %943 = vmatpush.msra.mxu0 0.0
        %944 = vmatpush.msra.mxu0 0.0
        %945 = vmatpush.msra.mxu0 0.0
        %946 = vmatpush.msra.mxu0 %v644
        %947 = vmatmul.f32.gmra.mxu0 %v929
        %v948 = vpop.f32.mrf.mxu0
        %v949 = vadd.f32 0.0, %v948
        %950 = vdwg.mxu0
        %v951 = vmul.f32 %v880, %v855
        %v952 = vmul.f32 %v903, %v856
        %v953 = vmul.f32 %v926, %v857
        %v954 = vmul.f32 %v949, %v858
        %v955 = vld [vmem:[#allocation15] sm:$0xff]
        %v956 = vld [vmem:[#allocation15 + $0x8] sm:$0xff]
        %v957 = vld [vmem:[#allocation15 + $0x10] sm:$0xff]
        %v958 = vld [vmem:[#allocation15 + $0x18] sm:$0xff]
        %v960 = vsel %vm595, %v952, 0
        %962 = vmatpush.msra.mxu0 0.0
        %963 = vmatpush.msra.mxu0 0.0
        %964 = vmatpush.msra.mxu0 0.0
        %965 = vmatpush.msra.mxu0 0.0
        %966 = vmatpush.msra.mxu0 0.0
        %967 = vmatpush.msra.mxu0 0.0
        %968 = vmatpush.msra.mxu0 0.0
        %969 = vmatpush.msra.mxu0 0.0
        %970 = vmatpush.msra.mxu0 0.0
        %971 = vmatpush.msra.mxu0 0.0
        %972 = vmatpush.msra.mxu0 0.0
        %973 = vmatpush.msra.mxu0 0.0
        %974 = vmatpush.msra.mxu0 0.0
        %975 = vmatpush.msra.mxu0 0.0
        %976 = vmatpush.msra.mxu0 0.0
        %977 = vmatpush.msra.mxu0 %v956
        %978 = vmatmul.f32.gmra.mxu0 %v960
        %v979 = vpop.f32.mrf.mxu0
        %v980 = vadd.f32 0.0, %v979
        %981 = vdwg.mxu0
        %v983 = vsel %vm595, %v951, 0
        %985 = vmatpush.msra.mxu0 0.0
        %986 = vmatpush.msra.mxu0 0.0
        %987 = vmatpush.msra.mxu0 0.0
        %988 = vmatpush.msra.mxu0 0.0
        %989 = vmatpush.msra.mxu0 0.0
        %990 = vmatpush.msra.mxu0 0.0
        %991 = vmatpush.msra.mxu0 0.0
        %992 = vmatpush.msra.mxu0 0.0
        %993 = vmatpush.msra.mxu0 0.0
        %994 = vmatpush.msra.mxu0 0.0
        %995 = vmatpush.msra.mxu0 0.0
        %996 = vmatpush.msra.mxu0 0.0
        %997 = vmatpush.msra.mxu0 0.0
        %998 = vmatpush.msra.mxu0 0.0
        %999 = vmatpush.msra.mxu0 0.0
        %1000 = vmatpush.msra.mxu0 %v955
        %1001 = vmatmul.f32.gmra.mxu0 %v983
        %v1002 = vpop.f32.mrf.mxu0
        %v1003 = vadd.f32 %v980, %v1002
        %1004 = vdwg.mxu0
        %v1006 = vsel %vm595, %v953, 0
        %1008 = vmatpush.msra.mxu0 0.0
        %1009 = vmatpush.msra.mxu0 0.0
        %1010 = vmatpush.msra.mxu0 0.0
        %1011 = vmatpush.msra.mxu0 0.0
        %1012 = vmatpush.msra.mxu0 0.0
        %1013 = vmatpush.msra.mxu0 0.0
        %1014 = vmatpush.msra.mxu0 0.0
        %1015 = vmatpush.msra.mxu0 0.0
        %1016 = vmatpush.msra.mxu0 0.0
        %1017 = vmatpush.msra.mxu0 0.0
        %1018 = vmatpush.msra.mxu0 0.0
        %1019 = vmatpush.msra.mxu0 0.0
        %1020 = vmatpush.msra.mxu0 0.0
        %1021 = vmatpush.msra.mxu0 0.0
        %1022 = vmatpush.msra.mxu0 0.0
        %1023 = vmatpush.msra.mxu0 %v957
        %1024 = vmatmul.f32.gmra.mxu0 %v1006
        %v1025 = vpop.f32.mrf.mxu0
        %v1026 = vadd.f32 0.0, %v1025
        %1027 = vdwg.mxu0
        %v1028 = vadd.f32 %v1003, %v1026
        %v1030 = vsel %vm595, %v954, 0
        %1032 = vmatpush.msra.mxu0 0.0
        %1033 = vmatpush.msra.mxu0 0.0
        %1034 = vmatpush.msra.mxu0 0.0
        %1035 = vmatpush.msra.mxu0 0.0
        %1036 = vmatpush.msra.mxu0 0.0
        %1037 = vmatpush.msra.mxu0 0.0
        %1038 = vmatpush.msra.mxu0 0.0
        %1039 = vmatpush.msra.mxu0 0.0
        %1040 = vmatpush.msra.mxu0 0.0
        %1041 = vmatpush.msra.mxu0 0.0
        %1042 = vmatpush.msra.mxu0 0.0
        %1043 = vmatpush.msra.mxu0 0.0
        %1044 = vmatpush.msra.mxu0 0.0
        %1045 = vmatpush.msra.mxu0 0.0
        %1046 = vmatpush.msra.mxu0 0.0
        %1047 = vmatpush.msra.mxu0 %v958
        %1048 = vmatmul.f32.gmra.mxu0 %v1030
        %v1049 = vpop.f32.mrf.mxu0
        %v1050 = vadd.f32 0.0, %v1049
        %1051 = vdwg.mxu0
        %v1052 = vadd.f32 %v1028, %v1050
        %v1053 = vld [vmem:[%s7] sm:$0x1]
        %v1055 = vperm.slane %v1053, 0
        %v1057 = vadd.f32 %v1052, %v1055
        %vm1058 = vcmask 261120
        %1059 = vst.msk [vmem:[%s483] sm:$0xff] %vm1058, %v1057
        %s1060 = sand.u32 %s237, 1
        %s1061 = scalar_lea.sflag [#allocation6], %s1060
        %s1062 = sand.u32 %s237, 1
        %s1063 = smul.addr %s1062, 8
        %s1064 = scalar_lea.vmem [#allocation16], %s1063
        // Predicated region
        $region85: #{tpu_custom_call.1} parent=51 // pred_check
          %p1065 = pneg %p247
        $region86: #{tpu_custom_call.1} parent=51 // pred_check_branch
          %1067 = sbr.rel (%p1065) target = $region88
        $region87: #{tpu_custom_call.1} parent=51 // pred_region
          %1069 = vsyncadd %s1061, 0
          %s1070 = sadd.s32 %s35, %s34
          %s1071 = smul.addr %s1070, 8
          %s1072 = scalar_lea.hbm %s8, %s1071
          %s1074 = sshll.u32 %s1064, 4
          %s1075 = int_to_ptr.vmem [resolvable:$true] %s1074
          %s1076 = sshll.u32 %s1072, 4
          %s1077 = int_to_ptr.hbm [resolvable:$true] %s1076
          %1079 = dma.vmem_to_hbm [thread:$0]  %s1075, 128, %s1077, %s1061
        $region88: #{tpu_custom_call.1} parent=51 // pred_fallthru
          _
      $region52: #{tpu_custom_call.1} parent=5 // pred_fallthru
        _
      %p1080 = scmp.le.s32.totalorder 2, %s25
      // Predicated region
      $region89: #{tpu_custom_call.1} parent=5 // pred_check
        %p1081 = pneg %p1080
      $region90: #{tpu_custom_call.1} parent=5 // pred_check_branch
        %1083 = sbr.rel (%p1081) target = $region92
      $region91: #{tpu_custom_call.1} parent=5 // pred_region
        %s1084 = ssub.s32 %s25, 2
        // Predicated region
        $region93: #{tpu_custom_call.1} parent=91 // pred_check
          %p1085 = pneg %p253
        $region94: #{tpu_custom_call.1} parent=91 // pred_check_branch
          %1087 = sbr.rel (%p1085) target = $region96
        $region95: #{tpu_custom_call.1} parent=91 // pred_region
          %s1088 = sand.u32 %s238, 1
          %s1089 = scalar_lea.sflag [#allocation6], %s1088
          %s1090 = sand.u32 %s238, 1
          %s1091 = smul.addr %s1090, 8
          %s1092 = scalar_lea.vmem [#allocation16], %s1091
          %1094 = dma.done %s1089, 128
        $region96: #{tpu_custom_call.1} parent=91 // pred_fallthru
          _
      $region92: #{tpu_custom_call.1} parent=5 // pred_fallthru
        _
    $region6: #{tpu_custom_call.1} parent=1 // loop_footer
      %s29 = sadd.s32 1, %s25
    $region7: #{tpu_custom_call.1} parent=1 // loop_footer_branch
      %24 = sbr.rel target = $region3
    $region8: #{tpu_custom_call.1} parent=1 // loop_exit
      _
    %1095 = vsyncpa [#allocation5], 1
    %s1096 = scalar_lea.sflag [#allocation5], 1
    %1097 = vsyncpa %s1096, 1
    %1098 = vsyncpa [#allocation8], 1
    %s1099 = scalar_lea.sflag [#allocation8], 1
    %1100 = vsyncpa %s1099, 1
    %1101 = vsyncpa [#allocation11], 1
    %1102 = vsyncpa [#allocation14], 1
    %1103 = vsyncpa [#allocation6], 1
    %s1104 = scalar_lea.sflag [#allocation6], 1
    %1105 = vsyncpa %s1104, 1

</llo_original>
